<compile_context>
chip_gen: v7x
topology: tpu7x:2x2x1
jax: 0.10.0
libtpu: 0.0.40
codegen_flags: <defaults>
</compile_context>

<pallas_src>
import jax
import jax.numpy as jnp
import numpy as np
from jax.experimental import pallas as pl
from jax.experimental.pallas import tpu as pltpu


# ---------------------------------------------------------------------------
# Kernel: fused GAP -> FC1 -> ReLU -> FC2 -> sigmoid -> channel gating
# ---------------------------------------------------------------------------

def _se_kernel(x_ref, w1_ref, w2_ref, o_ref):
    # x_ref : (1, C, HW)   one sample, channels on sublanes, spatial on lanes
    # w1_ref: (Cr, C)      PyTorch Linear(C -> Cr) weight, (out, in) layout
    # w2_ref: (C, Cr)      PyTorch Linear(Cr -> C) weight, (out, in) layout
    x = x_ref[0]                                   # (C, HW)
    hw = x.shape[1]
    xf = x.astype(jnp.float32)

    # Global average pool: lane-axis reduction -> per-channel column vector.
    s = jnp.sum(xf, axis=1, keepdims=True) * (1.0 / float(hw))      # (C, 1)

    # Squeeze / excite MLP as column matmuls (no transposes needed).
    h = jnp.dot(w1_ref[...], s, preferred_element_type=jnp.float32)  # (Cr, 1)
    h = jnp.maximum(h, 0.0)                                          # ReLU
    g = jnp.dot(w2_ref[...], h, preferred_element_type=jnp.float32)  # (C, 1)
    gate = jax.nn.sigmoid(g)                                         # (C, 1)

    # Channel-wise gating: broadcast the per-channel scalar along lanes.
    o_ref[0] = (xf * gate).astype(o_ref.dtype)


# ---------------------------------------------------------------------------
# pallas_call wrapper
# ---------------------------------------------------------------------------

def se_forward(x_nchw, w1, w2):
    B, C, H, W = x_nchw.shape
    HW = H * W
    Cr = w1.shape[0]
    assert w1.shape == (Cr, C) and w2.shape == (C, Cr)

    x2 = x_nchw.reshape(B, C, HW)                  # contiguous reshape (free)

    out = pl.pallas_call(
        _se_kernel,
        out_shape=jax.ShapeDtypeStruct((B, C, HW), x_nchw.dtype),
        grid=(B,),
        in_specs=[
            pl.BlockSpec((1, C, HW), lambda b: (b, 0, 0)),   # one sample
            pl.BlockSpec((Cr, C), lambda b: (0, 0)),          # resident weight
            pl.BlockSpec((C, Cr), lambda b: (0, 0)),          # resident weight
        ],
        out_specs=pl.BlockSpec((1, C, HW), lambda b: (b, 0, 0)),
        compiler_params=pltpu.CompilerParams(
            dimension_semantics=("parallel",)),                # megacore on v7x
    )(x2, w1, w2)

    return out.reshape(B, C, H, W)


# ---------------------------------------------------------------------------
# Pure-JAX reference (mirrors the PyTorch module) for a correctness check
# ---------------------------------------------------------------------------

def ref_forward(x, w1, w2):
    s = jnp.mean(x, axis=(2, 3))                          # (B, C)
    h = jax.nn.relu(s @ w1.T)                             # (B, Cr)
    y = jax.nn.sigmoid(h @ w2.T)                          # (B, C)
    return x * y[:, :, None, None]


if __name__ == "__main__":
    # Small shapes consistent with SE(inchannel, ratio=16): need C >= ratio.
    B, C, H, W = 2, 64, 16, 16
    ratio = 16
    Cr = C // ratio                                       # = 4

    key = jax.random.PRNGKey(0)
    kx, k1, k2 = jax.random.split(key, 3)
    x = jax.random.normal(kx, (B, C, H, W), jnp.float32)
    # nn.Linear default init: U(-1/sqrt(fan_in), 1/sqrt(fan_in)), (out, in) layout.
    w1 = jax.random.uniform(k1, (Cr, C), jnp.float32,
                            minval=-1.0 / np.sqrt(C), maxval=1.0 / np.sqrt(C))
    w2 = jax.random.uniform(k2, (C, Cr), jnp.float32,
                            minval=-1.0 / np.sqrt(Cr), maxval=1.0 / np.sqrt(Cr))

    out = jax.jit(se_forward)(x, w1, w2)
    out = jax.block_until_ready(out)

    ref = ref_forward(x, w1, w2)
    np.testing.assert_allclose(np.asarray(out), np.asarray(ref),
                               rtol=1e-5, atol=1e-5)
    print("KERNEL_OK")
</pallas_src>

<mosaic_0001>
module attributes {stable_mosaic.version = 11 : i64} {
  func.func @_se_kernel(%arg0: i32, %arg1: memref<1x64x256xf32, #tpu.memory_space<vmem>>, %arg2: memref<4x64xf32, #tpu.memory_space<vmem>>, %arg3: memref<64x4xf32, #tpu.memory_space<vmem>>, %arg4: memref<1x64x256xf32, #tpu.memory_space<vmem>>) attributes {dimension_semantics = [#tpu.dimension_semantics<parallel>], iteration_bounds = array<i64: 2>, scalar_prefetch = 0 : i64, scratch_operands = 0 : i64, tpu.core_type = #tpu.core_type<tc>, window_params = [{transform_indices = @transform_0, window_bounds = array<i64: 1, 64, 256>}, {pipeline_mode = #tpu.pipeline_mode<synchronous>, transform_indices = @transform_1, window_bounds = array<i64: 4, 64>}, {pipeline_mode = #tpu.pipeline_mode<synchronous>, transform_indices = @transform_2, window_bounds = array<i64: 64, 4>}, {transform_indices = @transform_3, window_bounds = array<i64: 1, 64, 256>}]} {
    %c0 = arith.constant 0 : index
    %c0_0 = arith.constant 0 : index
    %c0_1 = arith.constant 0 : index
    %0 = vector.load %arg1[%c0, %c0_0, %c0_1] : memref<1x64x256xf32, #tpu.memory_space<vmem>>, vector<1x64x256xf32>
    %1 = vector.shape_cast %0 : vector<1x64x256xf32> to vector<64x256xf32>
    %cst = arith.constant dense<0.000000e+00> : vector<64xf32>
    %2 = vector.multi_reduction <add>, %1, %cst [1] : vector<64x256xf32> to vector<64xf32>
    %3 = vector.shape_cast %2 : vector<64xf32> to vector<64x1xf32>
    %cst_2 = arith.constant 3.906250e-03 : f32
    %4 = vector.broadcast %cst_2 : f32 to vector<64x1xf32>
    %5 = arith.mulf %3, %4 : vector<64x1xf32>
    %c0_3 = arith.constant 0 : index
    %c0_4 = arith.constant 0 : index
    %6 = vector.load %arg2[%c0_3, %c0_4] : memref<4x64xf32, #tpu.memory_space<vmem>>, vector<4x64xf32>
    %cst_5 = arith.constant dense<0.000000e+00> : vector<4x1xf32>
    %7 = tpu.matmul %6, %5, %cst_5 {dimension_numbers = #tpu.dot_dimension_numbers<[1], [0], [0], [1], [0, 0, 1, 1], [], []>} : vector<4x64xf32>, vector<64x1xf32>, vector<4x1xf32> -> vector<4x1xf32>
    %cst_6 = arith.constant 0.000000e+00 : f32
    %8 = vector.broadcast %cst_6 : f32 to vector<4x1xf32>
    %9 = arith.maximumf %7, %8 : vector<4x1xf32>
    %c0_7 = arith.constant 0 : index
    %c0_8 = arith.constant 0 : index
    %10 = vector.load %arg3[%c0_7, %c0_8] : memref<64x4xf32, #tpu.memory_space<vmem>>, vector<64x4xf32>
    %cst_9 = arith.constant dense<0.000000e+00> : vector<64x1xf32>
    %11 = tpu.matmul %10, %9, %cst_9 {dimension_numbers = #tpu.dot_dimension_numbers<[1], [0], [0], [1], [0, 0, 1, 1], [], []>} : vector<64x4xf32>, vector<4x1xf32>, vector<64x1xf32> -> vector<64x1xf32>
    %12 = arith.negf %11 : vector<64x1xf32>
    %13 = math.exp %12 : vector<64x1xf32>
    %cst_10 = arith.constant 1.000000e+00 : f32
    %14 = vector.broadcast %cst_10 : f32 to vector<64x1xf32>
    %15 = arith.addf %14, %13 : vector<64x1xf32>
    %16 = arith.divf %14, %15 : vector<64x1xf32>
    %17 = vector.broadcast %16 : vector<64x1xf32> to vector<64x256xf32>
    %18 = arith.mulf %1, %17 : vector<64x256xf32>
    %c0_11 = arith.constant 0 : index
    %c0_12 = arith.constant 0 : index
    %c0_13 = arith.constant 0 : index
    %19 = vector.load %arg4[%c0_11, %c0_12, %c0_13] : memref<1x64x256xf32, #tpu.memory_space<vmem>>, vector<1x64x256xf32>
    %20 = vector.shape_cast %19 : vector<1x64x256xf32> to vector<64x256xf32>
    %21 = vector.shape_cast %18 : vector<64x256xf32> to vector<1x64x256xf32>
    tpu.vector_store %arg4[%c0_11, %c0_12, %c0_13], %21 {strides = array<i32>} : memref<1x64x256xf32, #tpu.memory_space<vmem>>, vector<1x64x256xf32>,
    return
  }
  func.func @transform_0(%arg0: i32) -> (i32, i32, i32) {
    %c0_i32 = arith.constant 0 : i32
    %c0_i32_0 = arith.constant 0 : i32
    %c0_i32_1 = arith.constant 0 : i32
    return %arg0, %c0_i32, %c0_i32_0 : i32, i32, i32
  }
  func.func @transform_1(%arg0: i32) -> (i32, i32) {
    %c0_i32 = arith.constant 0 : i32
    %c0_i32_0 = arith.constant 0 : i32
    %c0_i32_1 = arith.constant 0 : i32
    return %c0_i32, %c0_i32_0 : i32, i32
  }
  func.func @transform_2(%arg0: i32) -> (i32, i32) {
    %c0_i32 = arith.constant 0 : i32
    %c0_i32_0 = arith.constant 0 : i32
    %c0_i32_1 = arith.constant 0 : i32
    return %c0_i32, %c0_i32_0 : i32, i32
  }
  func.func @transform_3(%arg0: i32) -> (i32, i32, i32) {
    %c0_i32 = arith.constant 0 : i32
    %c0_i32_0 = arith.constant 0 : i32
    %c0_i32_1 = arith.constant 0 : i32
    return %arg0, %c0_i32, %c0_i32_0 : i32, i32, i32
  }
}

</mosaic_0001>

<llo_original>
// kernel: se_forward.1
$region0: #{se_forward.1}
  #allocation0 [shape = 'u32[]', space=smem, size = 0x4, offset = 0x4, fixed_abs, tag = 'smem constant byte address 0x4 - core index']
  #allocation1 [shape = 'u32[144,128]{1,0:T(1,128)}', space=vmem, size = 0x12000, scoped, tag = 'internal scratch']
  %s0 = inlined_call_operand.vmem [shape: f32[2,64,256], index: 0, kind: input, shape index: {}]
  %s1 = inlined_call_operand.vmem [shape: f32[4,64], index: 1, kind: input, shape index: {}]
  %s2 = inlined_call_operand.vmem [shape: f32[64,4], index: 2, kind: input, shape index: {}]
  %s3 = inlined_call_operand.vmem [shape: f32[2,64,256], index: 3, kind: output, shape index: {}]
  %s4 = sld [smem:[#allocation0]]
  $region45: #{se_forward.1} parent=0
    _
  %s6 = ssub.s32 1, %s4
  %s7 = scalar_select 0, %s6, %s4
  loop: start=0, step=1, limit=4
  $region2: #{se_forward.1} parent=0 // loop_pre_header
    _
  $region3: #{se_forward.1} parent=0 // loop_header
    %s9 = sphi 0, %s13
    %p10 = scmp.ge.s32.totalorder %s9, 4
    %s19 = sphi 0, %s21
    %s22 = sphi 0, %s19
    %s23 = sphi 0, %s22
    %s39 = sphi 0, %s23
    %s43 = sphi 0, %s43
    %s45 = sphi 0, %s43
    %s46 = sphi 0, %s45
    %s60 = sphi 0, %s46
    %s64 = sphi 0, %s64
    %s66 = sphi 0, %s64
    %s67 = sphi 0, %s66
    %s81 = sphi 0, %s67
    %s87 = sphi 0, %s89
    %s90 = sphi 0, %s87
    %s91 = sphi 0, %s90
    %s107 = sphi 0, %s91
  $region4: #{se_forward.1} parent=0 // loop_header_branch
    %12 = sbr.rel (%p10) target = $region8
  $region5: #{se_forward.1} parent=0 // loop_body
    %s14 = ssub.s32 %s9, 1
    %s15 = ssub.s32 %s9, 2
    %s16 = sadd.s32 %s9, 1
    %s17 = ssub.s32 %s9, %s16
    %p18 = scmp.eq.s32.totalorder %s17, 0
    %s20 = sadd.s32 %s19, 1
    %s21 = scalar_select %p18, %s19, %s20
    %p24 = pneg %p18
    %p25 = scmp.eq.s32.totalorder %s9, 1
    %p26 = por %p24, %p25
    %p27 = scmp.ne.s32.totalorder %s19, %s22
    %p28 = scmp.eq.s32.totalorder %s9, 0
    %p29 = por %p27, %p28
    %p30 = scmp.ne.s32.totalorder %s19, %s22
    %p31 = scmp.eq.s32.totalorder %s14, 1
    %p32 = por %p30, %p31
    %p33 = scmp.ne.s32.totalorder %s22, %s23
    %p34 = scmp.eq.s32.totalorder %s14, 0
    %p35 = por %p33, %p34
    %p36 = scmp.ne.s32.totalorder %s22, %s23
    %p37 = scmp.eq.s32.totalorder %s15, 1
    %p38 = por %p36, %p37
    %p40 = scmp.ne.s32.totalorder %s23, %s39
    %p41 = scmp.eq.s32.totalorder %s15, 0
    %p42 = por %p40, %p41
    %s44 = sadd.s32 %s43, 1
    %p47 = scmp.eq.s32.totalorder %s9, 1
    %p48 = scmp.ne.s32.totalorder %s43, %s45
    %p49 = scmp.eq.s32.totalorder %s9, 0
    %p50 = por %p48, %p49
    %p51 = scmp.ne.s32.totalorder %s43, %s45
    %p52 = scmp.eq.s32.totalorder %s14, 1
    %p53 = por %p51, %p52
    %p54 = scmp.ne.s32.totalorder %s45, %s46
    %p55 = scmp.eq.s32.totalorder %s14, 0
    %p56 = por %p54, %p55
    %p57 = scmp.ne.s32.totalorder %s45, %s46
    %p58 = scmp.eq.s32.totalorder %s15, 1
    %p59 = por %p57, %p58
    %p61 = scmp.ne.s32.totalorder %s46, %s60
    %p62 = scmp.eq.s32.totalorder %s15, 0
    %p63 = por %p61, %p62
    %s65 = sadd.s32 %s64, 1
    %p68 = scmp.eq.s32.totalorder %s9, 1
    %p69 = scmp.ne.s32.totalorder %s64, %s66
    %p70 = scmp.eq.s32.totalorder %s9, 0
    %p71 = por %p69, %p70
    %p72 = scmp.ne.s32.totalorder %s64, %s66
    %p73 = scmp.eq.s32.totalorder %s14, 1
    %p74 = por %p72, %p73
    %p75 = scmp.ne.s32.totalorder %s66, %s67
    %p76 = scmp.eq.s32.totalorder %s14, 0
    %p77 = por %p75, %p76
    %p78 = scmp.ne.s32.totalorder %s66, %s67
    %p79 = scmp.eq.s32.totalorder %s15, 1
    %p80 = por %p78, %p79
    %p82 = scmp.ne.s32.totalorder %s67, %s81
    %p83 = scmp.eq.s32.totalorder %s15, 0
    %p84 = por %p82, %p83
    %s85 = ssub.s32 %s9, %s16
    %p86 = scmp.eq.s32.totalorder %s85, 0
    %s88 = sadd.s32 %s87, 1
    %s89 = scalar_select %p86, %s87, %s88
    %p92 = pneg %p86
    %p93 = scmp.eq.s32.totalorder %s9, 1
    %p94 = por %p92, %p93
    %p95 = scmp.ne.s32.totalorder %s87, %s90
    %p96 = scmp.eq.s32.totalorder %s9, 0
    %p97 = por %p95, %p96
    %p98 = scmp.ne.s32.totalorder %s87, %s90
    %p99 = scmp.eq.s32.totalorder %s14, 1
    %p100 = por %p98, %p99
    %p101 = scmp.ne.s32.totalorder %s90, %s91
    %p102 = scmp.eq.s32.totalorder %s14, 0
    %p103 = por %p101, %p102
    %p104 = scmp.ne.s32.totalorder %s90, %s91
    %p105 = scmp.eq.s32.totalorder %s15, 1
    %p106 = por %p104, %p105
    %p108 = scmp.ne.s32.totalorder %s91, %s107
    %p109 = scmp.eq.s32.totalorder %s15, 0
    %p110 = por %p108, %p109
    %p111 = scmp.le.s32.totalorder 1, %s9
    %p112 = scmp.lt.s32.totalorder %s9, 3
    %p113 = pnand %p111, %p112
    %p114 = pneg %p113
    // Predicated region
    $region9: #{se_forward.1} parent=5 // pred_check
      _
    $region10: #{se_forward.1} parent=5 // pred_check_branch
      %116 = sbr.rel (%p113) target = $region12
    $region11: #{se_forward.1} parent=5 // pred_region
      %s117 = ssub.s32 %s9, 1
      // Predicated region
      $region13: #{se_forward.1} parent=11 // pred_check
        %p118 = pneg %p56
      $region14: #{se_forward.1} parent=11 // pred_check_branch
        %120 = sbr.rel (%p118) target = $region16
      $region15: #{se_forward.1} parent=11 // pred_region
        _
      $region16: #{se_forward.1} parent=11 // pred_fallthru
        _
      // Predicated region
      $region17: #{se_forward.1} parent=11 // pred_check
        %p121 = pneg %p77
      $region18: #{se_forward.1} parent=11 // pred_check_branch
        %123 = sbr.rel (%p121) target = $region20
      $region19: #{se_forward.1} parent=11 // pred_region
        _
      $region20: #{se_forward.1} parent=11 // pred_fallthru
        _
    $region12: #{se_forward.1} parent=5 // pred_fallthru
      _
    %p124 = scmp.lt.s32.totalorder %s9, 2
    // Predicated region
    $region21: #{se_forward.1} parent=5 // pred_check
      %p125 = pneg %p124
    $region22: #{se_forward.1} parent=5 // pred_check_branch
      %127 = sbr.rel (%p125) target = $region24
    $region23: #{se_forward.1} parent=5 // pred_region
      // Predicated region
      $region25: #{se_forward.1} parent=23 // pred_check
        %p128 = pneg %p29
      $region26: #{se_forward.1} parent=23 // pred_check_branch
        %130 = sbr.rel (%p128) target = $region28
      $region27: #{se_forward.1} parent=23 // pred_region
        %p131 = scmp.lt.s32.totalorder %s9, 1
        %s132 = scalar_select %p131, %s9, 1
        %s133 = smul.addr %s132, 16
        %s134 = smul.addr %s133, 8
        %s135 = scalar_lea.vmem %s0, %s134
      $region28: #{se_forward.1} parent=23 // pred_fallthru
        _
    $region24: #{se_forward.1} parent=5 // pred_fallthru
      _
    %p136 = scmp.le.s32.totalorder 1, %s9
    %p137 = scmp.lt.s32.totalorder %s9, 3
    %p138 = pnand %p136, %p137
    %p139 = pneg %p138
    // Predicated region
    $region29: #{se_forward.1} parent=5 // pred_check
      _
    $region30: #{se_forward.1} parent=5 // pred_check_branch
      %141 = sbr.rel (%p138) target = $region32
    $region31: #{se_forward.1} parent=5 // pred_region
      %s142 = ssub.s32 %s9, 1
      %p143 = scmp.lt.s32.totalorder %s14, 1
      %s144 = scalar_select %p143, %s14, 1
      %s145 = smul.addr %s144, 16
      %s146 = smul.addr %s145, 8
      %s147 = scalar_lea.vmem %s0, %s146
      %p148 = pneg %p35
      %p149 = pneg %p32
      %p150 = pneg %p56
      %p151 = pneg %p53
      %p152 = pneg %p77
      %p153 = pneg %p74
      %p154 = pneg %p103
      %p155 = pneg %p100
      %p156 = scmp.lt.s32.totalorder %s14, 1
      %s157 = scalar_select %p156, %s14, 1
      %s158 = smul.addr %s157, 16
      %s159 = smul.addr %s158, 8
      %s160 = scalar_lea.vmem %s3, %s159
      %p161 = scmp.lt.s32.totalorder %s14, 1
      %s162 = scalar_select %p161, %s14, 1
      %s163 = smul.addr %s162, 16
      %s164 = smul.addr %s163, 8
      %s165 = scalar_lea.vmem %s0, %s164
      %p166 = scmp.lt.s32.totalorder %s14, 1
      %s167 = scalar_select %p166, %s14, 1
      %s168 = smul.addr %s167, 16
      %s169 = smul.addr %s168, 8
      %s170 = scalar_lea.vmem %s3, %s169
      %v171 = vld [vmem:[%s165] sm:$0xff]
      %v172 = vld [vmem:[%s165 + $0x8] sm:$0xff]
      %v173 = vld [vmem:[%s165 + $0x10] sm:$0xff]
      %v174 = vld [vmem:[%s165 + $0x18] sm:$0xff]
      %v175 = vld [vmem:[%s165 + $0x20] sm:$0xff]
      %v176 = vld [vmem:[%s165 + $0x28] sm:$0xff]
      %v177 = vld [vmem:[%s165 + $0x30] sm:$0xff]
      %v178 = vld [vmem:[%s165 + $0x38] sm:$0xff]
      %v179 = vld [vmem:[%s165 + $0x40] sm:$0xff]
      %v180 = vld [vmem:[%s165 + $0x48] sm:$0xff]
      %v181 = vld [vmem:[%s165 + $0x50] sm:$0xff]
      %v182 = vld [vmem:[%s165 + $0x58] sm:$0xff]
      %v183 = vld [vmem:[%s165 + $0x60] sm:$0xff]
      %v184 = vld [vmem:[%s165 + $0x68] sm:$0xff]
      %v185 = vld [vmem:[%s165 + $0x70] sm:$0xff]
      %v186 = vld [vmem:[%s165 + $0x78] sm:$0xff]
      %v187 = vadd.f32 %v171, %v172
      %188 = vadd.xlane.f32.xlu0 %v187
      %v189 = vpop.xlane.xlu0 %188
      %v190 = vadd.f32 %v173, %v174
      %191 = vadd.xlane.f32.xlu0 %v190
      %v192 = vpop.xlane.xlu0 %191
      %v193 = vadd.f32 %v175, %v176
      %194 = vadd.xlane.f32.xlu0 %v193
      %v195 = vpop.xlane.xlu0 %194
      %v196 = vadd.f32 %v177, %v178
      %197 = vadd.xlane.f32.xlu0 %v196
      %v198 = vpop.xlane.xlu0 %197
      %v199 = vadd.f32 %v179, %v180
      %200 = vadd.xlane.f32.xlu0 %v199
      %v201 = vpop.xlane.xlu0 %200
      %v202 = vadd.f32 %v181, %v182
      %203 = vadd.xlane.f32.xlu0 %v202
      %v204 = vpop.xlane.xlu0 %203
      %v205 = vadd.f32 %v183, %v184
      %206 = vadd.xlane.f32.xlu0 %v205
      %v207 = vpop.xlane.xlu0 %206
      %v208 = vadd.f32 %v185, %v186
      %209 = vadd.xlane.f32.xlu0 %v208
      %v210 = vpop.xlane.xlu0 %209
      %v211 = vmul.f32 %v189, 0.00390625
      %v212 = vmul.f32 %v192, 0.00390625
      %v213 = vmul.f32 %v195, 0.00390625
      %v214 = vmul.f32 %v198, 0.00390625
      %v215 = vmul.f32 %v201, 0.00390625
      %v216 = vmul.f32 %v204, 0.00390625
      %v217 = vmul.f32 %v207, 0.00390625
      %v218 = vmul.f32 %v210, 0.00390625
      %v219 = vld [vmem:[%s1] sm:$0xf]
      %vm220 = vcmask 523264
      %v222 = vsel %vm220, %v219, 0
      %224 = vmatprep.subr.mxu0 0.0
      %225 = vmatpush1.msra.mxu0 %v211
      %226 = vmatprep.subr.mxu0 0.0
      %227 = vmatpush1.msra.mxu0 %v212
      %228 = vmatprep.subr.mxu0 0.0
      %229 = vmatpush1.msra.mxu0 %v213
      %230 = vmatprep.subr.mxu0 0.0
      %231 = vmatpush1.msra.mxu0 %v214
      %232 = vmatprep.subr.mxu0 0.0
      %233 = vmatpush1.msra.mxu0 %v215
      %234 = vmatprep.subr.mxu0 0.0
      %235 = vmatpush1.msra.mxu0 %v216
      %236 = vmatprep.subr.mxu0 0.0
      %237 = vmatpush1.msra.mxu0 %v217
      %238 = vmatprep.subr.mxu0 0.0
      %239 = vmatpush1.msra.mxu0 %v218
      %240 = vmatprep.subr.mxu0 0.0
      %241 = vmatpush1.msra.mxu0 0.0
      %242 = vmatprep.subr.mxu0 0.0
      %243 = vmatpush1.msra.mxu0 0.0
      %244 = vmatprep.subr.mxu0 0.0
      %245 = vmatpush1.msra.mxu0 0.0
      %246 = vmatprep.subr.mxu0 0.0
      %247 = vmatpush1.msra.mxu0 0.0
      %248 = vmatprep.subr.mxu0 0.0
      %249 = vmatpush1.msra.mxu0 0.0
      %250 = vmatprep.subr.mxu0 0.0
      %251 = vmatpush1.msra.mxu0 0.0
      %252 = vmatprep.subr.mxu0 0.0
      %253 = vmatpush1.msra.mxu0 0.0
      %254 = vmatprep.subr.mxu0 0.0
      %255 = vmatpush1.msra.mxu0 0.0
      %256 = vmatprep.subr.mxu0 0.0
      %257 = vmatpush1.msra.mxu0 0.0
      %258 = vmatprep.subr.mxu0 0.0
      %259 = vmatpush1.msra.mxu0 0.0
      %260 = vmatprep.subr.mxu0 0.0
      %261 = vmatpush1.msra.mxu0 0.0
      %262 = vmatprep.subr.mxu0 0.0
      %263 = vmatpush1.msra.mxu0 0.0
      %264 = vmatprep.subr.mxu0 0.0
      %265 = vmatpush1.msra.mxu0 0.0
      %266 = vmatprep.subr.mxu0 0.0
      %267 = vmatpush1.msra.mxu0 0.0
      %268 = vmatprep.subr.mxu0 0.0
      %269 = vmatpush1.msra.mxu0 0.0
      %270 = vmatprep.subr.mxu0 0.0
      %271 = vmatpush1.msra.mxu0 0.0
      %272 = vmatprep.subr.mxu0 0.0
      %273 = vmatpush1.msra.mxu0 0.0
      %274 = vmatprep.subr.mxu0 0.0
      %275 = vmatpush1.msra.mxu0 0.0
      %276 = vmatprep.subr.mxu0 0.0
      %277 = vmatpush1.msra.mxu0 0.0
      %278 = vmatprep.subr.mxu0 0.0
      %279 = vmatpush1.msra.mxu0 0.0
      %280 = vmatprep.subr.mxu0 0.0
      %281 = vmatpush1.msra.mxu0 0.0
      %282 = vmatprep.subr.mxu0 0.0
      %283 = vmatpush1.msra.mxu0 0.0
      %284 = vmatprep.subr.mxu0 0.0
      %285 = vmatpush1.msra.mxu0 0.0
      %286 = vmatprep.subr.mxu0 0.0
      %287 = vmatpush1.msra.mxu0 0.0
      %288 = vmatprep.mubr.f32.mxu0 0.0
      %289 = vmatmul.mubr.f32.gmra.mrb[0].mxu0 %v222
      %v290 = vpop.f32.mrb[0].mxu0
      %v291 = vadd.f32 0.0, %v290
      %v292 = vpop.f32.mrb[0].mxu0
      %293 = vdwg.mxu0
      %v294 = vmax.f32 %v291, 0.0
      %v295 = vld [vmem:[%s2] sm:$0xff]
      %v296 = vld [vmem:[%s2 + $0x8] sm:$0xff]
      %v297 = vld [vmem:[%s2 + $0x10] sm:$0xff]
      %v298 = vld [vmem:[%s2 + $0x18] sm:$0xff]
      %v299 = vld [vmem:[%s2 + $0x20] sm:$0xff]
      %v300 = vld [vmem:[%s2 + $0x28] sm:$0xff]
      %v301 = vld [vmem:[%s2 + $0x30] sm:$0xff]
      %v302 = vld [vmem:[%s2 + $0x38] sm:$0xff]
      %vm303 = vcmask 31744
      %v305 = vsel %vm303, %v295, 0
      %v308 = vsel %vm303, %v296, 0
      %v311 = vsel %vm303, %v297, 0
      %v314 = vsel %vm303, %v298, 0
      %v317 = vsel %vm303, %v299, 0
      %v320 = vsel %vm303, %v300, 0
      %v323 = vsel %vm303, %v301, 0
      %v326 = vsel %vm303, %v302, 0
      %vm328 = vcmask 1043456
      %v330 = vsel %vm328, %v294, 0
      %332 = vmatprep.subr.mxu0 0.0
      %333 = vmatpush1.msra.mxu0 %v330
      %334 = vmatprep.subr.mxu0 0.0
      %335 = vmatpush1.msra.mxu0 0.0
      %336 = vmatprep.subr.mxu0 0.0
      %337 = vmatpush1.msra.mxu0 0.0
      %338 = vmatprep.subr.mxu0 0.0
      %339 = vmatpush1.msra.mxu0 0.0
      %340 = vmatprep.subr.mxu0 0.0
      %341 = vmatpush1.msra.mxu0 0.0
      %342 = vmatprep.subr.mxu0 0.0
      %343 = vmatpush1.msra.mxu0 0.0
      %344 = vmatprep.subr.mxu0 0.0
      %345 = vmatpush1.msra.mxu0 0.0
      %346 = vmatprep.subr.mxu0 0.0
      %347 = vmatpush1.msra.mxu0 0.0
      %348 = vmatprep.subr.mxu0 0.0
      %349 = vmatpush1.msra.mxu0 0.0
      %350 = vmatprep.subr.mxu0 0.0
      %351 = vmatpush1.msra.mxu0 0.0
      %352 = vmatprep.subr.mxu0 0.0
      %353 = vmatpush1.msra.mxu0 0.0
      %354 = vmatprep.subr.mxu0 0.0
      %355 = vmatpush1.msra.mxu0 0.0
      %356 = vmatprep.subr.mxu0 0.0
      %357 = vmatpush1.msra.mxu0 0.0
      %358 = vmatprep.subr.mxu0 0.0
      %359 = vmatpush1.msra.mxu0 0.0
      %360 = vmatprep.subr.mxu0 0.0
      %361 = vmatpush1.msra.mxu0 0.0
      %362 = vmatprep.subr.mxu0 0.0
      %363 = vmatpush1.msra.mxu0 0.0
      %364 = vmatprep.subr.mxu0 0.0
      %365 = vmatpush1.msra.mxu0 0.0
      %366 = vmatprep.subr.mxu0 0.0
      %367 = vmatpush1.msra.mxu0 0.0
      %368 = vmatprep.subr.mxu0 0.0
      %369 = vmatpush1.msra.mxu0 0.0
      %370 = vmatprep.subr.mxu0 0.0
      %371 = vmatpush1.msra.mxu0 0.0
      %372 = vmatprep.subr.mxu0 0.0
      %373 = vmatpush1.msra.mxu0 0.0
      %374 = vmatprep.subr.mxu0 0.0
      %375 = vmatpush1.msra.mxu0 0.0
      %376 = vmatprep.subr.mxu0 0.0
      %377 = vmatpush1.msra.mxu0 0.0
      %378 = vmatprep.subr.mxu0 0.0
      %379 = vmatpush1.msra.mxu0 0.0
      %380 = vmatprep.subr.mxu0 0.0
      %381 = vmatpush1.msra.mxu0 0.0
      %382 = vmatprep.subr.mxu0 0.0
      %383 = vmatpush1.msra.mxu0 0.0
      %384 = vmatprep.subr.mxu0 0.0
      %385 = vmatpush1.msra.mxu0 0.0
      %386 = vmatprep.subr.mxu0 0.0
      %387 = vmatpush1.msra.mxu0 0.0
      %388 = vmatprep.subr.mxu0 0.0
      %389 = vmatpush1.msra.mxu0 0.0
      %390 = vmatprep.subr.mxu0 0.0
      %391 = vmatpush1.msra.mxu0 0.0
      %392 = vmatprep.subr.mxu0 0.0
      %393 = vmatpush1.msra.mxu0 0.0
      %394 = vmatprep.subr.mxu0 0.0
      %395 = vmatpush1.msra.mxu0 0.0
      %396 = vmatprep.mubr.f32.mxu0 0.0
      %397 = vmatmul.mubr.f32.gmra.mrb[0].mxu0 %v305
      %v398 = vpop.f32.mrb[0].mxu0
      %v399 = vadd.f32 0.0, %v398
      %v400 = vpop.f32.mrb[0].mxu0
      %401 = vmatprep.mubr.f32.mxu0 0.0
      %402 = vmatmul.mubr.f32.gmra.mrb[0].mxu0 %v308
      %v403 = vpop.f32.mrb[0].mxu0
      %v404 = vadd.f32 0.0, %v403
      %v405 = vpop.f32.mrb[0].mxu0
      %406 = vmatprep.mubr.f32.mxu0 0.0
      %407 = vmatmul.mubr.f32.gmra.mrb[0].mxu0 %v311
      %v408 = vpop.f32.mrb[0].mxu0
      %v409 = vadd.f32 0.0, %v408
      %v410 = vpop.f32.mrb[0].mxu0
      %411 = vmatprep.mubr.f32.mxu0 0.0
      %412 = vmatmul.mubr.f32.gmra.mrb[0].mxu0 %v314
      %v413 = vpop.f32.mrb[0].mxu0
      %v414 = vadd.f32 0.0, %v413
      %v415 = vpop.f32.mrb[0].mxu0
      %416 = vmatprep.mubr.f32.mxu0 0.0
      %417 = vmatmul.mubr.f32.gmra.mrb[0].mxu0 %v317
      %v418 = vpop.f32.mrb[0].mxu0
      %v419 = vadd.f32 0.0, %v418
      %v420 = vpop.f32.mrb[0].mxu0
      %421 = vmatprep.mubr.f32.mxu0 0.0
      %422 = vmatmul.mubr.f32.gmra.mrb[0].mxu0 %v320
      %v423 = vpop.f32.mrb[0].mxu0
      %v424 = vadd.f32 0.0, %v423
      %v425 = vpop.f32.mrb[0].mxu0
      %426 = vmatprep.mubr.f32.mxu0 0.0
      %427 = vmatmul.mubr.f32.gmra.mrb[0].mxu0 %v323
      %v428 = vpop.f32.mrb[0].mxu0
      %v429 = vadd.f32 0.0, %v428
      %v430 = vpop.f32.mrb[0].mxu0
      %431 = vmatprep.mubr.f32.mxu0 0.0
      %432 = vmatmul.mubr.f32.gmra.mrb[0].mxu0 %v326
      %v433 = vpop.f32.mrb[0].mxu0
      %v434 = vadd.f32 0.0, %v433
      %v435 = vpop.f32.mrb[0].mxu0
      %436 = vdwg.mxu0
      %v437 = vxor.u32 %v399, 2147483648
      %v438 = vxor.u32 %v404, 2147483648
      %v439 = vxor.u32 %v409, 2147483648
      %v440 = vxor.u32 %v414, 2147483648
      %v441 = vxor.u32 %v419, 2147483648
      %v442 = vxor.u32 %v424, 2147483648
      %v443 = vxor.u32 %v429, 2147483648
      %v444 = vxor.u32 %v434, 2147483648
      %v445 = vmul.f32 %v437, 1.442695
      %v446 = vpow.pop %v445
      %v447 = vmul.f32 %v438, 1.442695
      %v448 = vpow.pop %v447
      %v449 = vmul.f32 %v439, 1.442695
      %v450 = vpow.pop %v449
      %v451 = vmul.f32 %v440, 1.442695
      %v452 = vpow.pop %v451
      %v453 = vmul.f32 %v441, 1.442695
      %v454 = vpow.pop %v453
      %v455 = vmul.f32 %v442, 1.442695
      %v456 = vpow.pop %v455
      %v457 = vmul.f32 %v443, 1.442695
      %v458 = vpow.pop %v457
      %v459 = vmul.f32 %v444, 1.442695
      %v460 = vpow.pop %v459
      %v461 = vadd.f32 %v446, 1.0
      %v462 = vadd.f32 %v448, 1.0
      %v463 = vadd.f32 %v450, 1.0
      %v464 = vadd.f32 %v452, 1.0
      %v465 = vadd.f32 %v454, 1.0
      %v466 = vadd.f32 %v456, 1.0
      %v467 = vadd.f32 %v458, 1.0
      %v468 = vadd.f32 %v460, 1.0
      %v469 = vrcp.pop %v461
      %v470 = vmul.f32 1.0, %v469
      %v471 = vrcp.pop %v462
      %v472 = vmul.f32 1.0, %v471
      %v473 = vrcp.pop %v463
      %v474 = vmul.f32 1.0, %v473
      %v475 = vrcp.pop %v464
      %v476 = vmul.f32 1.0, %v475
      %v477 = vrcp.pop %v465
      %v478 = vmul.f32 1.0, %v477
      %v479 = vrcp.pop %v466
      %v480 = vmul.f32 1.0, %v479
      %v481 = vrcp.pop %v467
      %v482 = vmul.f32 1.0, %v481
      %v483 = vrcp.pop %v468
      %v484 = vmul.f32 1.0, %v483
      %486 = vset.pattern.permute.xlu0 0
      %487 = vperm.xlu0 %486, %v470
      %v488 = vpop.permute.xlu0 %487
      %491 = vset.pattern.permute.xlu0 0
      %492 = vperm.xlu0 %491, %v472
      %v493 = vpop.permute.xlu0 %492
      %496 = vset.pattern.permute.xlu0 0
      %497 = vperm.xlu0 %496, %v474
      %v498 = vpop.permute.xlu0 %497
      %501 = vset.pattern.permute.xlu0 0
      %502 = vperm.xlu0 %501, %v476
      %v503 = vpop.permute.xlu0 %502
      %506 = vset.pattern.permute.xlu0 0
      %507 = vperm.xlu0 %506, %v478
      %v508 = vpop.permute.xlu0 %507
      %511 = vset.pattern.permute.xlu0 0
      %512 = vperm.xlu0 %511, %v480
      %v513 = vpop.permute.xlu0 %512
      %516 = vset.pattern.permute.xlu0 0
      %517 = vperm.xlu0 %516, %v482
      %v518 = vpop.permute.xlu0 %517
      %521 = vset.pattern.permute.xlu0 0
      %522 = vperm.xlu0 %521, %v484
      %v523 = vpop.permute.xlu0 %522
      %v525 = vmul.f32 %v171, %v488
      %v526 = vmul.f32 %v172, %v488
      %v527 = vmul.f32 %v173, %v493
      %v528 = vmul.f32 %v174, %v493
      %v529 = vmul.f32 %v175, %v498
      %v530 = vmul.f32 %v176, %v498
      %v531 = vmul.f32 %v177, %v503
      %v532 = vmul.f32 %v178, %v503
      %v533 = vmul.f32 %v179, %v508
      %v534 = vmul.f32 %v180, %v508
      %v535 = vmul.f32 %v181, %v513
      %v536 = vmul.f32 %v182, %v513
      %v537 = vmul.f32 %v183, %v518
      %v538 = vmul.f32 %v184, %v518
      %v539 = vmul.f32 %v185, %v523
      %v540 = vmul.f32 %v186, %v523
      %541 = vst [vmem:[%s170] sm:$0xff] %v525
      %542 = vst [vmem:[%s170 + $0x8] sm:$0xff] %v526
      %543 = vst [vmem:[%s170 + $0x10] sm:$0xff] %v527
      %544 = vst [vmem:[%s170 + $0x18] sm:$0xff] %v528
      %545 = vst [vmem:[%s170 + $0x20] sm:$0xff] %v529
      %546 = vst [vmem:[%s170 + $0x28] sm:$0xff] %v530
      %547 = vst [vmem:[%s170 + $0x30] sm:$0xff] %v531
      %548 = vst [vmem:[%s170 + $0x38] sm:$0xff] %v532
      %549 = vst [vmem:[%s170 + $0x40] sm:$0xff] %v533
      %550 = vst [vmem:[%s170 + $0x48] sm:$0xff] %v534
      %551 = vst [vmem:[%s170 + $0x50] sm:$0xff] %v535
      %552 = vst [vmem:[%s170 + $0x58] sm:$0xff] %v536
      %553 = vst [vmem:[%s170 + $0x60] sm:$0xff] %v537
      %554 = vst [vmem:[%s170 + $0x68] sm:$0xff] %v538
      %555 = vst [vmem:[%s170 + $0x70] sm:$0xff] %v539
      %556 = vst [vmem:[%s170 + $0x78] sm:$0xff] %v540
      %p557 = scmp.lt.s32.totalorder %s14, 1
      %s558 = scalar_select %p557, %s14, 1
      %s559 = smul.addr %s558, 16
      %s560 = smul.addr %s559, 8
      %s561 = scalar_lea.vmem %s3, %s560
      // Predicated region
      $region33: #{se_forward.1} parent=31 // pred_check
        %p562 = pneg %p100
      $region34: #{se_forward.1} parent=31 // pred_check_branch
        %564 = sbr.rel (%p562) target = $region36
      $region35: #{se_forward.1} parent=31 // pred_region
        _
      $region36: #{se_forward.1} parent=31 // pred_fallthru
        _
    $region32: #{se_forward.1} parent=5 // pred_fallthru
      _
    %p565 = scmp.le.s32.totalorder 2, %s9
    // Predicated region
    $region37: #{se_forward.1} parent=5 // pred_check
      %p566 = pneg %p565
    $region38: #{se_forward.1} parent=5 // pred_check_branch
      %568 = sbr.rel (%p566) target = $region40
    $region39: #{se_forward.1} parent=5 // pred_region
      %s569 = ssub.s32 %s9, 2
      // Predicated region
      $region41: #{se_forward.1} parent=39 // pred_check
        %p570 = pneg %p106
      $region42: #{se_forward.1} parent=39 // pred_check_branch
        %572 = sbr.rel (%p570) target = $region44
      $region43: #{se_forward.1} parent=39 // pred_region
        %p573 = scmp.lt.s32.totalorder %s15, 1
        %s574 = scalar_select %p573, %s15, 1
        %s575 = smul.addr %s574, 16
        %s576 = smul.addr %s575, 8
        %s577 = scalar_lea.vmem %s3, %s576
      $region44: #{se_forward.1} parent=39 // pred_fallthru
        _
    $region40: #{se_forward.1} parent=5 // pred_fallthru
      _
  $region6: #{se_forward.1} parent=0 // loop_footer
    %s13 = sadd.s32 1, %s9
  $region7: #{se_forward.1} parent=0 // loop_footer_branch
    %8 = sbr.rel target = $region3
  $region8: #{se_forward.1} parent=0 // loop_exit
    _

</llo_original>
